<compile_context>
chip_gen: v6e
topology: v6e:2x2x1
jax: 0.10.0
libtpu: 0.0.40
codegen_flags: <defaults>
</compile_context>

<pallas_src>
import functools

import jax
import jax.numpy as jnp
from jax.experimental import pallas as pl
from jax.experimental.pallas import tpu as pltpu


def _round_up(a: int, b: int) -> int:
    return (a + b - 1) // b * b


def _vmem_budget_bytes() -> int:
    """Usable VMEM budget with headroom for Mosaic internal scratch."""
    try:
        phys = int(pltpu.get_tpu_info().vmem_capacity_bytes)
    except Exception:
        phys = 64 << 20            # conservative (v7x-sized) fallback
    # ~100 MiB on 128 MiB parts (v5e/v6e), ~48 MiB on 64 MiB parts (v7x).
    budget = min(int(phys * 0.78), phys - (16 << 20))
    return max(budget, 32 << 20)


def _fused_ln_swishgate_linear_kernel(eps,
                                      x_ref, o_ref, w_ref, lw_ref, lb_ref,
                                      out_ref, y_ref):
    # x_ref/o_ref: (tm, N)   w_ref: (1, N)   lw_ref: (N, td)   lb_ref: (1, td)
    # out_ref:     (tm, td)  y_ref (scratch): (tm, N) in the matmul dtype
    j = pl.program_id(1)

    # LN + swish gate computed once per row tile; the output-column axis (j)
    # reuses the cached gated activations.
    @pl.when(j == 0)
    def _():
        x = x_ref[...].astype(jnp.float32)
        o = o_ref[...].astype(jnp.float32)
        w = w_ref[...].astype(jnp.float32)

        mean = jnp.mean(x, axis=-1, keepdims=True)
        xbar = x - mean
        var = jnp.mean(xbar * xbar, axis=-1, keepdims=True)
        rstd = jax.lax.rsqrt(var + eps)

        y = xbar * rstd * w                 # elementwise-affine weight (bias is None)
        y = y * o * jax.nn.sigmoid(o)       # swish gate: y * o * sigmoid(o)
        y_ref[...] = y.astype(y_ref.dtype)  # cast to matmul dtype (bf16 fast path)

    # Native MXU path: operands stay in the weight dtype, accumulate in f32.
    acc = jnp.dot(y_ref[...], lw_ref[...], preferred_element_type=jnp.float32)
    out_ref[...] = (acc + lb_ref[...].astype(jnp.float32)).astype(out_ref.dtype)


def fused_layernorm_swish_gate_linear(x, o, norm_weight, linear_weight,
                                      linear_bias, *, eps=1e-5,
                                      block_rows=None, block_out=512):
    """x, o: (..., N); norm_weight: (N,); linear_weight: (D, N); linear_bias: (D,)."""
    orig_shape = x.shape
    N = x.shape[-1]
    D = linear_weight.shape[0]
    x2 = x.reshape(-1, N)
    o2 = o.reshape(-1, N)
    M = x2.shape[0]

    mm_dtype = linear_weight.dtype           # matmul operand dtype
    out_dtype = x.dtype
    isz = lambda dt: jnp.dtype(dt).itemsize
    x_isz, o_isz = isz(x2.dtype), isz(o2.dtype)
    mm_isz, out_isz = isz(mm_dtype), isz(out_dtype)
    w_isz, lb_isz = isz(norm_weight.dtype), isz(linear_bias.dtype)

    budget = _vmem_budget_bytes()

    # Row alignment driven by both the input dtype and the matmul dtype so the
    # packed-sublane (bf16/int8) tiles are never half-populated.
    row_align = max(8, 32 // mm_isz, 32 // x_isz)

    # --- output-column tile: pad D to a lane-dense multiple of 128 ---
    D_pad = _round_up(D, 128)

    full_w_bytes = 2 * N * D_pad * mm_isz            # double-buffer accounting
    if full_w_bytes <= budget // 2:
        # Weight fully resident: with a constant column block index it is
        # DMA'd from HBM exactly once, eliminating weight re-streaming.
        td = D_pad
    else:
        td = 128
        slab_budget = budget // 4
        for cand in (max(128, (int(block_out) // 128) * 128), 512, 256, 128):
            if D_pad % cand == 0 and 2 * N * cand * mm_isz <= slab_budget:
                td = cand
                break
    num_d = D_pad // td

    # --- row tile: as large as the remaining VMEM budget allows ---
    fixed = 2 * N * td * mm_isz + 2 * N * w_isz + 2 * td * lb_isz + (2 << 20)
    per_row = 2 * N * (x_isz + o_isz) + 2 * td * out_isz + N * mm_isz
    tm_cap = max(row_align,
                 ((budget - fixed) // per_row) // row_align * row_align)
    tm_hint = 1024 if block_rows is None else max(row_align, int(block_rows))
    tm = min(tm_cap, _round_up(tm_hint, row_align), _round_up(M, row_align))
    tm = max(row_align, (tm // row_align) * row_align)

    # When the weight is fully resident, splitting a single row tile into two
    # is free (weight still fetched once) and feeds both v7x TensorCores.
    if num_d == 1 and _round_up(M, tm) // tm == 1 and M > row_align:
        half = _round_up((M + 1) // 2, row_align)
        if half < tm:
            tm = half

    M_pad = _round_up(M, tm)
    if M_pad != M:
        pad = M_pad - M
        x2 = jnp.pad(x2, ((0, pad), (0, 0)))
        o2 = jnp.pad(o2, ((0, pad), (0, 0)))
    num_m = M_pad // tm

    w2 = norm_weight.reshape(1, N)
    # TODO(synk): if linear_weight is not a jit-time constant and this op is
    # called repeatedly, pre-transpose / pre-pad it once at parameter-prep
    # time; under jit with constant weights this transpose+pad is folded.
    lw_t = jnp.transpose(linear_weight).astype(mm_dtype)    # (N, D), lane-dense on D
    lb2 = linear_bias.reshape(1, D)
    if D_pad != D:
        lw_t = jnp.pad(lw_t, ((0, 0), (0, D_pad - D)))
        lb2 = jnp.pad(lb2, ((0, 0), (0, D_pad - D)))

    # --- VMEM limit sized from the actual tile footprint, within budget ---
    footprint = (2 * tm * N * (x_isz + o_isz) + 2 * N * w_isz
                 + 2 * N * td * mm_isz + 2 * td * lb_isz
                 + 2 * tm * td * out_isz + tm * N * mm_isz)
    vmem_limit = int(min(max(int(footprint * 1.25) + (4 << 20), 32 << 20),
                         budget))

    # Real traffic: the weight slab is re-read once per row tile unless it is
    # fully resident (constant block index -> fetched once).
    weight_reads = 1 if num_d == 1 else num_m
    cost = pl.CostEstimate(
        flops=2 * M_pad * N * D_pad + 10 * M_pad * N,
        transcendentals=M_pad * N + M_pad,          # sigmoid per elem + rsqrt per row
        bytes_accessed=(x2.nbytes + o2.nbytes + w2.nbytes
                        + weight_reads * lw_t.nbytes + lb2.nbytes
                        + M_pad * D_pad * out_isz),
    )

    out = pl.pallas_call(
        functools.partial(_fused_ln_swishgate_linear_kernel, eps),
        out_shape=jax.ShapeDtypeStruct((M_pad, D_pad), out_dtype),
        grid_spec=pltpu.PrefetchScalarGridSpec(
            num_scalar_prefetch=0,
            grid=(num_m, num_d),
            in_specs=[
                pl.BlockSpec((tm, N), lambda i, j: (i, 0)),    # x rows
                pl.BlockSpec((tm, N), lambda i, j: (i, 0)),    # o rows
                pl.BlockSpec((1, N), lambda i, j: (0, 0)),     # norm weight
                pl.BlockSpec((N, td), lambda i, j: (0, j)),    # linear weight^T slab
                pl.BlockSpec((1, td), lambda i, j: (0, j)),    # linear bias slab
            ],
            out_specs=pl.BlockSpec((tm, td), lambda i, j: (i, j)),
            scratch_shapes=[pltpu.VMEM((tm, N), mm_dtype)],    # cached gated y
        ),
        compiler_params=pltpu.CompilerParams(
            dimension_semantics=("parallel", "arbitrary"),
            vmem_limit_bytes=vmem_limit),
        cost_estimate=cost,
    )(x2, o2, w2, lw_t, lb2)

    out = out[:M, :D]
    return out.reshape(orig_shape[:-1] + (D,))


def _reference(x, o, norm_weight, linear_weight, linear_bias, eps=1e-5):
    # Mirrors the module: LN/gate in f32, matmul in the linear weight dtype
    # with f32 accumulation, output in x.dtype.
    xf = x.astype(jnp.float32)
    of = o.astype(jnp.float32)
    mean = jnp.mean(xf, axis=-1, keepdims=True)
    var = jnp.mean((xf - mean) ** 2, axis=-1, keepdims=True)
    y = (xf - mean) / jnp.sqrt(var + eps) * norm_weight.astype(jnp.float32)
    y = y * of * jax.nn.sigmoid(of)
    y = y.astype(linear_weight.dtype)
    out = jnp.dot(y, linear_weight.T, preferred_element_type=jnp.float32)
    out = out + linear_bias.astype(jnp.float32)
    return out.astype(x.dtype)


if __name__ == "__main__":
    eps = 1e-5

    # --- Test 1: small f32 shapes from the module spec ---
    k1, k2, k3, k4 = jax.random.split(jax.random.PRNGKey(0), 4)
    batch, seq, hidden, out_features = 2, 8, 32, 32
    x = jax.random.normal(k1, (batch, seq, hidden), dtype=jnp.float32)
    o = jax.random.normal(k2, (batch, seq, hidden), dtype=jnp.float32)
    norm_weight = jnp.ones((hidden,), dtype=jnp.float32)
    linear_weight = jax.random.normal(k3, (out_features, hidden),
                                      dtype=jnp.float32) * 0.05
    linear_bias = jax.random.normal(k4, (out_features,), dtype=jnp.float32) * 0.05

    out = fused_layernorm_swish_gate_linear(
        x, o, norm_weight, linear_weight, linear_bias, eps=eps)
    out = jax.block_until_ready(out)
    ref = _reference(x, o, norm_weight, linear_weight, linear_bias, eps=eps)
    assert out.shape == (batch, seq, out_features)
    assert jnp.allclose(out, ref, atol=1e-4, rtol=1e-4)

    # --- Test 2: bf16, exercises row padding, multiple row tiles, D padding ---
    k5, k6, k7, k8 = jax.random.split(jax.random.PRNGKey(1), 4)
    batch2, seq2, hidden2, out2 = 2, 24, 128, 192     # D=192 -> padded to 256
    xb = jax.random.normal(k5, (batch2, seq2, hidden2), dtype=jnp.bfloat16)
    ob = jax.random.normal(k6, (batch2, seq2, hidden2), dtype=jnp.bfloat16)
    nwb = jnp.ones((hidden2,), dtype=jnp.bfloat16)
    lwb = (jax.random.normal(k7, (out2, hidden2), dtype=jnp.float32) * 0.05
           ).astype(jnp.bfloat16)
    lbb = (jax.random.normal(k8, (out2,), dtype=jnp.float32) * 0.05
           ).astype(jnp.bfloat16)

    outb = fused_layernorm_swish_gate_linear(
        xb, ob, nwb, lwb, lbb, eps=eps, block_rows=32, block_out=128)
    outb = jax.block_until_ready(outb)
    refb = _reference(xb, ob, nwb, lwb, lbb, eps=eps)
    assert outb.shape == (batch2, seq2, out2)
    assert jnp.allclose(outb.astype(jnp.float32), refb.astype(jnp.float32),
                        atol=2e-2, rtol=2e-2)

    # --- Test 3: mixed dtype (f32 activations, bf16 weight) + odd D ---
    k9, k10, k11, k12 = jax.random.split(jax.random.PRNGKey(2), 4)
    batch3, seq3, hidden3, out3 = 2, 16, 64, 200      # D=200 -> padded to 256
    xc = jax.random.normal(k9, (batch3, seq3, hidden3), dtype=jnp.float32)
    oc = jax.random.normal(k10, (batch3, seq3, hidden3), dtype=jnp.float32)
    nwc = jnp.ones((hidden3,), dtype=jnp.float32)
    lwc = (jax.random.normal(k11, (out3, hidden3), dtype=jnp.float32) * 0.05
           ).astype(jnp.bfloat16)
    lbc = (jax.random.normal(k12, (out3,), dtype=jnp.float32) * 0.05
           ).astype(jnp.bfloat16)

    outc = fused_layernorm_swish_gate_linear(
        xc, oc, nwc, lwc, lbc, eps=eps)
    outc = jax.block_until_ready(outc)
    refc = _reference(xc, oc, nwc, lwc, lbc, eps=eps)
    assert outc.shape == (batch3, seq3, out3)
    assert jnp.allclose(outc, refc, atol=2e-2, rtol=2e-2)

    print("KERNEL_OK")
</pallas_src>

<mosaic_0001>
module attributes {stable_mosaic.version = 11 : i64} {
  func.func @_fused_ln_swishgate_linear_kernel(%arg0: i32, %arg1: i32, %arg2: memref<8x32xf32, #tpu.memory_space<vmem>>, %arg3: memref<8x32xf32, #tpu.memory_space<vmem>>, %arg4: memref<1x32xf32, #tpu.memory_space<vmem>>, %arg5: memref<32x128xf32, #tpu.memory_space<vmem>>, %arg6: memref<1x128xf32, #tpu.memory_space<vmem>>, %arg7: memref<8x128xf32, #tpu.memory_space<vmem>>, %arg8: memref<8x32xf32, #tpu.memory_space<vmem>>) attributes {dimension_semantics = [#tpu.dimension_semantics<parallel>, #tpu.dimension_semantics<arbitrary>], iteration_bounds = array<i64: 2, 1>, scalar_prefetch = 0 : i64, scratch_operands = 1 : i64, tpu.core_type = #tpu.core_type<tc>, window_params = [{transform_indices = @transform_0, window_bounds = array<i64: 8, 32>}, {transform_indices = @transform_1, window_bounds = array<i64: 8, 32>}, {pipeline_mode = #tpu.pipeline_mode<synchronous>, transform_indices = @transform_2, window_bounds = array<i64: 1, 32>}, {transform_indices = @transform_3, window_bounds = array<i64: 32, 128>}, {transform_indices = @transform_4, window_bounds = array<i64: 1, 128>}, {transform_indices = @transform_5, window_bounds = array<i64: 8, 128>}]} {
    %c0_i32 = arith.constant 0 : i32
    %0 = arith.cmpi eq, %arg1, %c0_i32 : i32
    %1 = arith.extui %0 : i1 to i32
    %c0_i32_0 = arith.constant 0 : i32
    %2 = arith.cmpi ne, %1, %c0_i32_0 : i32
    scf.if %2 {
      %c0_8 = arith.constant 0 : index
      %c0_9 = arith.constant 0 : index
      %10 = vector.load %arg2[%c0_8, %c0_9] : memref<8x32xf32, #tpu.memory_space<vmem>>, vector<8x32xf32>
      %c0_10 = arith.constant 0 : index
      %c0_11 = arith.constant 0 : index
      %11 = vector.load %arg3[%c0_10, %c0_11] : memref<8x32xf32, #tpu.memory_space<vmem>>, vector<8x32xf32>
      %c0_12 = arith.constant 0 : index
      %c0_13 = arith.constant 0 : index
      %12 = vector.load %arg4[%c0_12, %c0_13] : memref<1x32xf32, #tpu.memory_space<vmem>>, vector<1x32xf32>
      %cst_14 = arith.constant dense<0.000000e+00> : vector<8xf32>
      %13 = vector.multi_reduction <add>, %10, %cst_14 [1] : vector<8x32xf32> to vector<8xf32>
      %14 = vector.shape_cast %13 : vector<8xf32> to vector<8x1xf32>
      %cst_15 = arith.constant 3.200000e+01 : f32
      %15 = vector.broadcast %cst_15 : f32 to vector<8x1xf32>
      %16 = arith.divf %14, %15 : vector<8x1xf32>
      %17 = vector.broadcast %16 : vector<8x1xf32> to vector<8x32xf32>
      %18 = arith.subf %10, %17 : vector<8x32xf32>
      %19 = arith.mulf %18, %18 : vector<8x32xf32>
      %cst_16 = arith.constant dense<0.000000e+00> : vector<8xf32>
      %20 = vector.multi_reduction <add>, %19, %cst_16 [1] : vector<8x32xf32> to vector<8xf32>
      %21 = vector.shape_cast %20 : vector<8xf32> to vector<8x1xf32>
      %cst_17 = arith.constant 3.200000e+01 : f32
      %22 = vector.broadcast %cst_17 : f32 to vector<8x1xf32>
      %23 = arith.divf %21, %22 : vector<8x1xf32>
      %cst_18 = arith.constant 9.99999974E-6 : f32
      %24 = vector.broadcast %cst_18 : f32 to vector<8x1xf32>
      %25 = arith.addf %23, %24 : vector<8x1xf32>
      %26 = math.rsqrt %25 : vector<8x1xf32>
      %27 = vector.broadcast %26 : vector<8x1xf32> to vector<8x32xf32>
      %28 = arith.mulf %18, %27 : vector<8x32xf32>
      %29 = vector.broadcast %12 : vector<1x32xf32> to vector<8x32xf32>
      %30 = arith.mulf %28, %29 : vector<8x32xf32>
      %31 = arith.mulf %30, %11 : vector<8x32xf32>
      %32 = arith.negf %11 : vector<8x32xf32>
      %33 = math.exp %32 : vector<8x32xf32>
      %cst_19 = arith.constant 1.000000e+00 : f32
      %34 = vector.broadcast %cst_19 : f32 to vector<8x32xf32>
      %35 = arith.addf %34, %33 : vector<8x32xf32>
      %36 = arith.divf %34, %35 : vector<8x32xf32>
      %37 = arith.mulf %31, %36 : vector<8x32xf32>
      %c0_20 = arith.constant 0 : index
      %c0_21 = arith.constant 0 : index
      %38 = vector.load %arg8[%c0_20, %c0_21] : memref<8x32xf32, #tpu.memory_space<vmem>>, vector<8x32xf32>
      tpu.vector_store %arg8[%c0_20, %c0_21], %37 {strides = array<i32>} : memref<8x32xf32, #tpu.memory_space<vmem>>, vector<8x32xf32>,
    } else {
    }
    %c0 = arith.constant 0 : index
    %c0_1 = arith.constant 0 : index
    %3 = vector.load %arg8[%c0, %c0_1] : memref<8x32xf32, #tpu.memory_space<vmem>>, vector<8x32xf32>
    %c0_2 = arith.constant 0 : index
    %c0_3 = arith.constant 0 : index
    %4 = vector.load %arg5[%c0_2, %c0_3] : memref<32x128xf32, #tpu.memory_space<vmem>>, vector<32x128xf32>
    %cst = arith.constant dense<0.000000e+00> : vector<8x128xf32>
    %5 = tpu.matmul %3, %4, %cst {dimension_numbers = #tpu.dot_dimension_numbers<[1], [0], [0], [1], [0, 0, 1, 1], [], []>} : vector<8x32xf32>, vector<32x128xf32>, vector<8x128xf32> -> vector<8x128xf32>
    %c0_4 = arith.constant 0 : index
    %c0_5 = arith.constant 0 : index
    %6 = vector.load %arg6[%c0_4, %c0_5] : memref<1x128xf32, #tpu.memory_space<vmem>>, vector<1x128xf32>
    %7 = vector.broadcast %6 : vector<1x128xf32> to vector<8x128xf32>
    %8 = arith.addf %5, %7 : vector<8x128xf32>
    %c0_6 = arith.constant 0 : index
    %c0_7 = arith.constant 0 : index
    %9 = vector.load %arg7[%c0_6, %c0_7] : memref<8x128xf32, #tpu.memory_space<vmem>>, vector<8x128xf32>
    tpu.vector_store %arg7[%c0_6, %c0_7], %8 {strides = array<i32>} : memref<8x128xf32, #tpu.memory_space<vmem>>, vector<8x128xf32>,
    return
  }
  func.func @transform_0(%arg0: i32, %arg1: i32) -> (i32, i32) {
    %c0_i32 = arith.constant 0 : i32
    %c0_i32_0 = arith.constant 0 : i32
    return %arg0, %c0_i32 : i32, i32
  }
  func.func @transform_1(%arg0: i32, %arg1: i32) -> (i32, i32) {
    %c0_i32 = arith.constant 0 : i32
    %c0_i32_0 = arith.constant 0 : i32
    return %arg0, %c0_i32 : i32, i32
  }
  func.func @transform_2(%arg0: i32, %arg1: i32) -> (i32, i32) {
    %c0_i32 = arith.constant 0 : i32
    %c0_i32_0 = arith.constant 0 : i32
    %c0_i32_1 = arith.constant 0 : i32
    return %c0_i32, %c0_i32_0 : i32, i32
  }
  func.func @transform_3(%arg0: i32, %arg1: i32) -> (i32, i32) {
    %c0_i32 = arith.constant 0 : i32
    %c0_i32_0 = arith.constant 0 : i32
    return %c0_i32, %arg1 : i32, i32
  }
  func.func @transform_4(%arg0: i32, %arg1: i32) -> (i32, i32) {
    %c0_i32 = arith.constant 0 : i32
    %c0_i32_0 = arith.constant 0 : i32
    return %c0_i32, %arg1 : i32, i32
  }
  func.func @transform_5(%arg0: i32, %arg1: i32) -> (i32, i32) {
    %c0_i32 = arith.constant 0 : i32
    return %arg0, %arg1 : i32, i32
  }
}

</mosaic_0001>

<llo_original>
// kernel: tpu_custom_call.1
$region0: #{tpu_custom_call.1}
  #allocation0 [shape = 'u32[]', space=smem, size = 0x4, offset = 0x4, fixed_abs, tag = 'smem constant byte address 0x4 - core index']
  #allocation1 [shape = 'u32[144,128]{1,0:T(1,128)}', space=vmem, size = 0x12000, scoped, tag = 'internal scratch']
  #allocation2 [shape = 'f32[8,32]{1,0:T(8,128)}', space=vmem, size = 0x1000, scoped, tag = 'scratch operand']
  %s0 = inlined_call_operand.hbm [shape: f32[16,32], index: 0, kind: input, shape index: {}]
  %s1 = inlined_call_operand.hbm [shape: f32[16,32], index: 1, kind: input, shape index: {}]
  %s2 = inlined_call_operand.vmem [shape: f32[1,32], index: 2, kind: input, shape index: {}]
  %s3 = inlined_call_operand.hbm [shape: f32[32,128], index: 3, kind: input, shape index: {}]
  %s4 = inlined_call_operand.vmem [shape: f32[1,128], index: 4, kind: input, shape index: {}]
  %s5 = inlined_call_operand.hbm [shape: f32[16,128], index: 5, kind: output, shape index: {}]
  %s6 = sld [smem:[#allocation0]]
  $region69: #{tpu_custom_call.1} parent=0
    _
  %s8 = ssub.s32 1, %s6
  %s9 = scalar_select 0, %s8, %s6
  $region1: #{tpu_custom_call.1} parent=0
    #allocation3 [shape = 'u8[8192]{0}', space=vmem, size = 0x2000, scoped, tag = 'input window, operand 0']
    #allocation4 [shape = 's32[2]{0}', space=sflag, size = 0x8, scoped, tag = 'scoped memory for tpu_custom_call.1']
    #allocation5 [shape = 's32[2]{0}', space=sflag, size = 0x8, scoped, tag = 'scoped memory for tpu_custom_call.1']
    #allocation6 [shape = 'u8[8192]{0}', space=vmem, size = 0x2000, scoped, tag = 'input window, operand 1']
    #allocation7 [shape = 's32[2]{0}', space=sflag, size = 0x8, scoped, tag = 'scoped memory for tpu_custom_call.1']
    #allocation8 [shape = 'u8[16384]{0}', space=vmem, size = 0x4000, scoped, tag = 'input window, operand 3, single buffered']
    #allocation9 [shape = 'u8[8192]{0}', space=vmem, size = 0x2000, scoped, tag = 'output window, operand 0']
    %10 = vsyncpa [#allocation4], 0
    %s11 = scalar_lea.sflag [#allocation4], 1
    %12 = vsyncpa %s11, 0
    %13 = vsyncpa [#allocation7], 0
    %s14 = scalar_lea.sflag [#allocation7], 1
    %15 = vsyncpa %s14, 0
    %16 = vsyncpa [#allocation5], 0
    %s17 = scalar_lea.sflag [#allocation5], 1
    %18 = vsyncpa %s17, 0
    loop: start=0, step=1, limit=4
    $region2: #{tpu_custom_call.1} parent=1 // loop_pre_header
      _
    $region3: #{tpu_custom_call.1} parent=1 // loop_header
      %s20 = sphi 0, %s24
      %p21 = scmp.ge.s32.totalorder %s20, 4
      %s27 = sphi 0, %s39
      %s28 = sphi 0, %s35
      %s29 = sphi 0, %s27
      %s30 = sphi 0, %s28
      %s31 = sphi 0, %s29
      %s32 = sphi 0, %s30
      %s42 = sphi 0, %s44
      %s45 = sphi 0, %s42
      %s46 = sphi 0, %s45
      %s62 = sphi 0, %s46
      %s68 = sphi 0, %s70
      %s71 = sphi 0, %s68
      %s72 = sphi 0, %s71
      %s88 = sphi 0, %s72
      %s92 = sphi 0, %s92
      %s94 = sphi 0, %s92
      %s95 = sphi 0, %s94
      %s109 = sphi 0, %s95
      %s115 = sphi 0, %s117
      %s118 = sphi 0, %s115
      %s119 = sphi 0, %s118
      %s135 = sphi 0, %s119
      %s141 = sphi 0, %s143
      %s144 = sphi 0, %s141
      %s145 = sphi 0, %s144
      %s161 = sphi 0, %s145
      %s169 = sphi 0, %s171
      %s172 = sphi 0, %s169
      %s173 = sphi 0, %s172
      %s189 = sphi 0, %s173
    $region4: #{tpu_custom_call.1} parent=1 // loop_header_branch
      %23 = sbr.rel (%p21) target = $region8
    $region5: #{tpu_custom_call.1} parent=1 // loop_body
      %s25 = ssub.s32 %s20, 1
      %s26 = ssub.s32 %s20, 2
      %s33 = sadd.s32 1, %s28
      %p34 = scmp.ge.s32.totalorder %s33, 1
      %s35 = scalar_select %p34, 0, %s33
      %s36 = sadd.s32 1, %s27
      %s37 = scalar_select %p34, %s36, %s27
      %p38 = scmp.ge.s32.totalorder %s37, 2
      %s39 = scalar_select %p38, 0, %s37
      %s40 = ssub.s32 %s27, %s39
      %p41 = scmp.eq.s32.totalorder %s40, 0
      %s43 = sadd.s32 %s42, 1
      %s44 = scalar_select %p41, %s42, %s43
      %p47 = pneg %p41
      %p48 = scmp.eq.s32.totalorder %s20, 1
      %p49 = por %p47, %p48
      %p50 = scmp.ne.s32.totalorder %s42, %s45
      %p51 = scmp.eq.s32.totalorder %s20, 0
      %p52 = por %p50, %p51
      %p53 = scmp.ne.s32.totalorder %s42, %s45
      %p54 = scmp.eq.s32.totalorder %s25, 1
      %p55 = por %p53, %p54
      %p56 = scmp.ne.s32.totalorder %s45, %s46
      %p57 = scmp.eq.s32.totalorder %s25, 0
      %p58 = por %p56, %p57
      %p59 = scmp.ne.s32.totalorder %s45, %s46
      %p60 = scmp.eq.s32.totalorder %s26, 1
      %p61 = por %p59, %p60
      %p63 = scmp.ne.s32.totalorder %s46, %s62
      %p64 = scmp.eq.s32.totalorder %s26, 0
      %p65 = por %p63, %p64
      %s66 = ssub.s32 %s27, %s39
      %p67 = scmp.eq.s32.totalorder %s66, 0
      %s69 = sadd.s32 %s68, 1
      %s70 = scalar_select %p67, %s68, %s69
      %p73 = pneg %p67
      %p74 = scmp.eq.s32.totalorder %s20, 1
      %p75 = por %p73, %p74
      %p76 = scmp.ne.s32.totalorder %s68, %s71
      %p77 = scmp.eq.s32.totalorder %s20, 0
      %p78 = por %p76, %p77
      %p79 = scmp.ne.s32.totalorder %s68, %s71
      %p80 = scmp.eq.s32.totalorder %s25, 1
      %p81 = por %p79, %p80
      %p82 = scmp.ne.s32.totalorder %s71, %s72
      %p83 = scmp.eq.s32.totalorder %s25, 0
      %p84 = por %p82, %p83
      %p85 = scmp.ne.s32.totalorder %s71, %s72
      %p86 = scmp.eq.s32.totalorder %s26, 1
      %p87 = por %p85, %p86
      %p89 = scmp.ne.s32.totalorder %s72, %s88
      %p90 = scmp.eq.s32.totalorder %s26, 0
      %p91 = por %p89, %p90
      %s93 = sadd.s32 %s92, 1
      %p96 = scmp.eq.s32.totalorder %s20, 1
      %p97 = scmp.ne.s32.totalorder %s92, %s94
      %p98 = scmp.eq.s32.totalorder %s20, 0
      %p99 = por %p97, %p98
      %p100 = scmp.ne.s32.totalorder %s92, %s94
      %p101 = scmp.eq.s32.totalorder %s25, 1
      %p102 = por %p100, %p101
      %p103 = scmp.ne.s32.totalorder %s94, %s95
      %p104 = scmp.eq.s32.totalorder %s25, 0
      %p105 = por %p103, %p104
      %p106 = scmp.ne.s32.totalorder %s94, %s95
      %p107 = scmp.eq.s32.totalorder %s26, 1
      %p108 = por %p106, %p107
      %p110 = scmp.ne.s32.totalorder %s95, %s109
      %p111 = scmp.eq.s32.totalorder %s26, 0
      %p112 = por %p110, %p111
      %s113 = ssub.s32 %s28, %s35
      %p114 = scmp.eq.s32.totalorder %s113, 0
      %s116 = sadd.s32 %s115, 1
      %s117 = scalar_select %p114, %s115, %s116
      %p120 = pneg %p114
      %p121 = scmp.eq.s32.totalorder %s20, 1
      %p122 = por %p120, %p121
      %p123 = scmp.ne.s32.totalorder %s115, %s118
      %p124 = scmp.eq.s32.totalorder %s20, 0
      %p125 = por %p123, %p124
      %p126 = scmp.ne.s32.totalorder %s115, %s118
      %p127 = scmp.eq.s32.totalorder %s25, 1
      %p128 = por %p126, %p127
      %p129 = scmp.ne.s32.totalorder %s118, %s119
      %p130 = scmp.eq.s32.totalorder %s25, 0
      %p131 = por %p129, %p130
      %p132 = scmp.ne.s32.totalorder %s118, %s119
      %p133 = scmp.eq.s32.totalorder %s26, 1
      %p134 = por %p132, %p133
      %p136 = scmp.ne.s32.totalorder %s119, %s135
      %p137 = scmp.eq.s32.totalorder %s26, 0
      %p138 = por %p136, %p137
      %s139 = ssub.s32 %s28, %s35
      %p140 = scmp.eq.s32.totalorder %s139, 0
      %s142 = sadd.s32 %s141, 1
      %s143 = scalar_select %p140, %s141, %s142
      %p146 = pneg %p140
      %p147 = scmp.eq.s32.totalorder %s20, 1
      %p148 = por %p146, %p147
      %p149 = scmp.ne.s32.totalorder %s141, %s144
      %p150 = scmp.eq.s32.totalorder %s20, 0
      %p151 = por %p149, %p150
      %p152 = scmp.ne.s32.totalorder %s141, %s144
      %p153 = scmp.eq.s32.totalorder %s25, 1
      %p154 = por %p152, %p153
      %p155 = scmp.ne.s32.totalorder %s144, %s145
      %p156 = scmp.eq.s32.totalorder %s25, 0
      %p157 = por %p155, %p156
      %p158 = scmp.ne.s32.totalorder %s144, %s145
      %p159 = scmp.eq.s32.totalorder %s26, 1
      %p160 = por %p158, %p159
      %p162 = scmp.ne.s32.totalorder %s145, %s161
      %p163 = scmp.eq.s32.totalorder %s26, 0
      %p164 = por %p162, %p163
      %s165 = ssub.s32 %s27, %s39
      %s166 = ssub.s32 %s28, %s35
      %s167 = sor.u32 %s165, %s166
      %p168 = scmp.eq.s32.totalorder %s167, 0
      %s170 = sadd.s32 %s169, 1
      %s171 = scalar_select %p168, %s169, %s170
      %p174 = pneg %p168
      %p175 = scmp.eq.s32.totalorder %s20, 1
      %p176 = por %p174, %p175
      %p177 = scmp.ne.s32.totalorder %s169, %s172
      %p178 = scmp.eq.s32.totalorder %s20, 0
      %p179 = por %p177, %p178
      %p180 = scmp.ne.s32.totalorder %s169, %s172
      %p181 = scmp.eq.s32.totalorder %s25, 1
      %p182 = por %p180, %p181
      %p183 = scmp.ne.s32.totalorder %s172, %s173
      %p184 = scmp.eq.s32.totalorder %s25, 0
      %p185 = por %p183, %p184
      %p186 = scmp.ne.s32.totalorder %s172, %s173
      %p187 = scmp.eq.s32.totalorder %s26, 1
      %p188 = por %p186, %p187
      %p190 = scmp.ne.s32.totalorder %s173, %s189
      %p191 = scmp.eq.s32.totalorder %s26, 0
      %p192 = por %p190, %p191
      %p193 = scmp.le.s32.totalorder 1, %s20
      %p194 = scmp.lt.s32.totalorder %s20, 3
      %p195 = pnand %p193, %p194
      %p196 = pneg %p195
      // Predicated region
      $region9: #{tpu_custom_call.1} parent=5 // pred_check
        _
      $region10: #{tpu_custom_call.1} parent=5 // pred_check_branch
        %198 = sbr.rel (%p195) target = $region12
      $region11: #{tpu_custom_call.1} parent=5 // pred_region
        %s199 = ssub.s32 %s20, 1
        // Predicated region
        $region13: #{tpu_custom_call.1} parent=11 // pred_check
          %p200 = pneg %p105
        $region14: #{tpu_custom_call.1} parent=11 // pred_check_branch
          %202 = sbr.rel (%p200) target = $region16
        $region15: #{tpu_custom_call.1} parent=11 // pred_region
          _
        $region16: #{tpu_custom_call.1} parent=11 // pred_fallthru
          _
        // Predicated region
        $region17: #{tpu_custom_call.1} parent=11 // pred_check
          %p203 = pneg %p131
        $region18: #{tpu_custom_call.1} parent=11 // pred_check_branch
          %205 = sbr.rel (%p203) target = $region20
        $region19: #{tpu_custom_call.1} parent=11 // pred_region
          %s207 = ssub.s32 512, 512
          %208 = vsyncadd [#allocation7], %s207
          %s209 = smul.addr %s30, 128
          %s210 = scalar_lea.hbm %s3, %s209
          %s211 = sshll.u32 [#allocation8], 4
          %s212 = int_to_ptr.vmem [resolvable:$true] %s211
          %217 = dma.hbm_to_vmem [thread:$0]  %s210, 512, %s212, [#allocation7], 128, 128, 8
        $region20: #{tpu_custom_call.1} parent=11 // pred_fallthru
          _
        // Predicated region
        $region21: #{tpu_custom_call.1} parent=11 // pred_check
          %p218 = pneg %p157
        $region22: #{tpu_custom_call.1} parent=11 // pred_check_branch
          %220 = sbr.rel (%p218) target = $region24
        $region23: #{tpu_custom_call.1} parent=11 // pred_region
          %p221 = scmp.lt.s32.totalorder %s30, 0
          %s222 = scalar_select %p221, %s30, 0
          %s223 = scalar_lea.vmem %s4, %s222
        $region24: #{tpu_custom_call.1} parent=11 // pred_fallthru
          _
      $region12: #{tpu_custom_call.1} parent=5 // pred_fallthru
        _
      %p224 = scmp.lt.s32.totalorder %s20, 2
      // Predicated region
      $region25: #{tpu_custom_call.1} parent=5 // pred_check
        %p225 = pneg %p224
      $region26: #{tpu_custom_call.1} parent=5 // pred_check_branch
        %227 = sbr.rel (%p225) target = $region28
      $region27: #{tpu_custom_call.1} parent=5 // pred_region
        // Predicated region
        $region29: #{tpu_custom_call.1} parent=27 // pred_check
          %p228 = pneg %p52
        $region30: #{tpu_custom_call.1} parent=27 // pred_check_branch
          %230 = sbr.rel (%p228) target = $region32
        $region31: #{tpu_custom_call.1} parent=27 // pred_region
          %s231 = sand.u32 %s42, 1
          %s232 = scalar_lea.sflag [#allocation4], %s231
          %s233 = sand.u32 %s42, 1
          %s234 = smul.addr %s233, 8
          %s235 = scalar_lea.vmem [#allocation3], %s234
          %s237 = ssub.s32 128, 128
          %238 = vsyncadd %s232, %s237
          %s239 = smul.addr %s27, 128
          %s240 = scalar_lea.hbm %s0, %s239
          %s242 = sshll.u32 %s235, 4
          %s243 = int_to_ptr.vmem [resolvable:$true] %s242
          %245 = dma.hbm_to_vmem [thread:$0]  %s240, 128, %s243, %s232
        $region32: #{tpu_custom_call.1} parent=27 // pred_fallthru
          _
        // Predicated region
        $region33: #{tpu_custom_call.1} parent=27 // pred_check
          %p246 = pneg %p78
        $region34: #{tpu_custom_call.1} parent=27 // pred_check_branch
          %248 = sbr.rel (%p246) target = $region36
        $region35: #{tpu_custom_call.1} parent=27 // pred_region
          %s249 = sand.u32 %s20, 1
          %s250 = scalar_lea.sflag [#allocation7], %s249
          %s251 = sand.u32 %s68, 1
          %s252 = smul.addr %s251, 8
          %s253 = scalar_lea.vmem [#allocation6], %s252
          %s255 = ssub.s32 128, 128
          %256 = vsyncadd %s250, %s255
          %s257 = smul.addr %s27, 128
          %s258 = scalar_lea.hbm %s1, %s257
          %s260 = sshll.u32 %s253, 4
          %s261 = int_to_ptr.vmem [resolvable:$true] %s260
          %263 = dma.hbm_to_vmem [thread:$0]  %s258, 128, %s261, %s250
        $region36: #{tpu_custom_call.1} parent=27 // pred_fallthru
          _
      $region28: #{tpu_custom_call.1} parent=5 // pred_fallthru
        _
      %p264 = scmp.le.s32.totalorder 1, %s20
      %p265 = scmp.lt.s32.totalorder %s20, 3
      %p266 = pnand %p264, %p265
      %p267 = pneg %p266
      // Predicated region
      $region37: #{tpu_custom_call.1} parent=5 // pred_check
        _
      $region38: #{tpu_custom_call.1} parent=5 // pred_check_branch
        %269 = sbr.rel (%p266) target = $region40
      $region39: #{tpu_custom_call.1} parent=5 // pred_region
        %s270 = ssub.s32 %s20, 1
        %s271 = sand.u32 %s45, 1
        %s272 = scalar_lea.sflag [#allocation4], %s271
        %s273 = sand.u32 %s45, 1
        %s274 = smul.addr %s273, 8
        %s275 = scalar_lea.vmem [#allocation3], %s274
        // Predicated region
        $region41: #{tpu_custom_call.1} parent=39 // pred_check
          %p276 = pneg %p58
        $region42: #{tpu_custom_call.1} parent=39 // pred_check_branch
          %278 = sbr.rel (%p276) target = $region44
        $region43: #{tpu_custom_call.1} parent=39 // pred_region
          %279 = dma.done %s272, 128
        $region44: #{tpu_custom_call.1} parent=39 // pred_fallthru
          _
        %s280 = sand.u32 %s25, 1
        %s281 = scalar_lea.sflag [#allocation7], %s280
        %s282 = sand.u32 %s71, 1
        %s283 = smul.addr %s282, 8
        %s284 = scalar_lea.vmem [#allocation6], %s283
        // Predicated region
        $region45: #{tpu_custom_call.1} parent=39 // pred_check
          %p285 = pneg %p84
        $region46: #{tpu_custom_call.1} parent=39 // pred_check_branch
          %287 = sbr.rel (%p285) target = $region48
        $region47: #{tpu_custom_call.1} parent=39 // pred_region
          %288 = dma.done %s281, 128
        $region48: #{tpu_custom_call.1} parent=39 // pred_fallthru
          _
        // Predicated region
        $region49: #{tpu_custom_call.1} parent=39 // pred_check
          %p289 = pneg %p131
        $region50: #{tpu_custom_call.1} parent=39 // pred_check_branch
          %291 = sbr.rel (%p289) target = $region52
        $region51: #{tpu_custom_call.1} parent=39 // pred_region
          %292 = dma.done [#allocation7], 512
        $region52: #{tpu_custom_call.1} parent=39 // pred_fallthru
          _
        %s293 = sand.u32 %s45, 1
        %s294 = scalar_lea.sflag [#allocation4], %s293
        %s295 = sand.u32 %s45, 1
        %s296 = smul.addr %s295, 8
        %s297 = scalar_lea.vmem [#allocation3], %s296
        %p298 = pneg %p58
        %p299 = pneg %p55
        %s300 = sand.u32 %s25, 1
        %s301 = scalar_lea.sflag [#allocation7], %s300
        %s302 = sand.u32 %s71, 1
        %s303 = smul.addr %s302, 8
        %s304 = scalar_lea.vmem [#allocation6], %s303
        %p305 = pneg %p84
        %p306 = pneg %p81
        %p307 = pneg %p105
        %p308 = pneg %p102
        %p309 = pneg %p131
        %p310 = pneg %p128
        %p311 = scmp.lt.s32.totalorder %s30, 0
        %s312 = scalar_select %p311, %s30, 0
        %s313 = scalar_lea.vmem %s4, %s312
        %p314 = pneg %p157
        %p315 = pneg %p154
        %p316 = pneg %p185
        %p317 = pneg %p182
        %s318 = sand.u32 %s172, 1
        %s319 = scalar_lea.sflag [#allocation5], %s318
        %s320 = sand.u32 %s172, 1
        %s321 = smul.addr %s320, 8
        %s322 = scalar_lea.vmem [#allocation9], %s321
        %p323 = scmp.lt.s32.totalorder %s30, 0
        %s324 = scalar_select %p323, %s30, 0
        %s325 = scalar_lea.vmem %s4, %s324
        %p326 = scmp.eq.s32.totalorder %s30, 0
        // Predicated region
        $region53: #{tpu_custom_call.1} parent=39 // pred_check
          %p327 = pneg %p326
        $region54: #{tpu_custom_call.1} parent=39 // pred_check_branch
          %329 = sbr.rel (%p327) target = $region56
        $region55: #{tpu_custom_call.1} parent=39 // pred_region
          %v330 = vld [vmem:[%s275] sm:$0xff]
          %v331 = vld [vmem:[%s284] sm:$0xff]
          %v332 = vld [vmem:[%s2] sm:$0x1]
          %vm333 = vcmask 261120
          %v334 = vsel %vm333, %v330, 0.0
          %335 = vadd.xlane.f32.xlu0 %v334
          %v336 = vpop.xlane.xlu0 %335
          %v337 = vrcp.pop 32.0
          %v338 = vmul.f32 %v336, %v337
          %v339 = vsub.f32 %v330, %v338
          %v340 = vmul.f32 %v339, %v339
          %v341 = vsel %vm333, %v340, 0.0
          %342 = vadd.xlane.f32.xlu0 %v341
          %v343 = vpop.xlane.xlu0 %342
          %v344 = vmul.f32 %v343, %v337
          %v345 = vadd.f32 %v344, 1e-05
          %v346 = vrsqrt.pop %v345
          %v347 = vmul.f32 %v339, %v346
          %v349 = vlaneseq
          %v350 = vshrl.u32 %v349, 7
          %v351 = vsub.s32 0, %v350
          %v352 = vrot.slane %v332, %v351
          %v354 = vmul.f32 %v347, %v352
          %v355 = vmul.f32 %v354, %v331
          %v356 = vxor.u32 %v331, 2147483648
          %v357 = vmul.f32 %v356, 1.442695
          %v358 = vpow.pop %v357
          %v359 = vadd.f32 %v358, 1.0
          %v360 = vrcp.pop %v359
          %v361 = vmul.f32 1.0, %v360
          %v362 = vmul.f32 %v355, %v361
          %363 = vst.msk [vmem:[#allocation2] sm:$0xff] %vm333, %v362
        $region56: #{tpu_custom_call.1} parent=39 // pred_fallthru
          _
        %v364 = vld [vmem:[#allocation2] sm:$0xff]
        %v365 = vld [vmem:[#allocation8] sm:$0xff]
        %v366 = vld [vmem:[#allocation8 + $0x8] sm:$0xff]
        %v367 = vld [vmem:[#allocation8 + $0x10] sm:$0xff]
        %v368 = vld [vmem:[#allocation8 + $0x18] sm:$0xff]
        %v369 = vld [vmem:[%s325] sm:$0x1]
        %v371 = vlaneseq
        %v372 = vshrl.u32 %v371, 7
        %v373 = vsub.s32 0, %v372
        %v374 = vrot.slane %v369, %v373
        %vm376 = vcmask 261120
        %v378 = vsel %vm376, %v364, 0
        %380 = vmatprep.subr.mxu0 0.0
        %381 = vmatpush1.msra.mxu0 0.0
        %382 = vmatprep.subr.mxu0 0.0
        %383 = vmatpush1.msra.mxu0 0.0
        %384 = vmatprep.subr.mxu0 0.0
        %385 = vmatpush1.msra.mxu0 0.0
        %386 = vmatprep.subr.mxu0 0.0
        %387 = vmatpush1.msra.mxu0 0.0
        %388 = vmatprep.subr.mxu0 0.0
        %389 = vmatpush1.msra.mxu0 0.0
        %390 = vmatprep.subr.mxu0 0.0
        %391 = vmatpush1.msra.mxu0 0.0
        %392 = vmatprep.subr.mxu0 0.0
        %393 = vmatpush1.msra.mxu0 0.0
        %394 = vmatprep.subr.mxu0 0.0
        %395 = vmatpush1.msra.mxu0 0.0
        %396 = vmatprep.subr.mxu0 0.0
        %397 = vmatpush1.msra.mxu0 0.0
        %398 = vmatprep.subr.mxu0 0.0
        %399 = vmatpush1.msra.mxu0 0.0
        %400 = vmatprep.subr.mxu0 0.0
        %401 = vmatpush1.msra.mxu0 0.0
        %402 = vmatprep.subr.mxu0 0.0
        %403 = vmatpush1.msra.mxu0 0.0
        %404 = vmatprep.subr.mxu0 0.0
        %405 = vmatpush1.msra.mxu0 %v368
        %406 = vmatprep.subr.mxu0 0.0
        %407 = vmatpush1.msra.mxu0 %v367
        %408 = vmatprep.subr.mxu0 0.0
        %409 = vmatpush1.msra.mxu0 %v366
        %410 = vmatprep.subr.mxu0 0.0
        %411 = vmatpush1.msra.mxu0 %v365
        %412 = vmatprep.subr.mxu0 0.0
        %413 = vmatpush2.msra.mxu0 0.0
        %414 = vmatprep.subr.mxu0 0.0
        %415 = vmatpush2.msra.mxu0 0.0
        %416 = vmatprep.subr.mxu0 0.0
        %417 = vmatpush2.msra.mxu0 0.0
        %418 = vmatprep.subr.mxu0 0.0
        %419 = vmatpush2.msra.mxu0 0.0
        %420 = vmatprep.subr.mxu0 0.0
        %421 = vmatpush2.msra.mxu0 0.0
        %422 = vmatprep.subr.mxu0 0.0
        %423 = vmatpush2.msra.mxu0 0.0
        %424 = vmatprep.subr.mxu0 0.0
        %425 = vmatpush2.msra.mxu0 0.0
        %426 = vmatprep.subr.mxu0 0.0
        %427 = vmatpush2.msra.mxu0 0.0
        %428 = vmatprep.subr.mxu0 0.0
        %429 = vmatpush2.msra.mxu0 0.0
        %430 = vmatprep.subr.mxu0 0.0
        %431 = vmatpush2.msra.mxu0 0.0
        %432 = vmatprep.subr.mxu0 0.0
        %433 = vmatpush2.msra.mxu0 0.0
        %434 = vmatprep.subr.mxu0 0.0
        %435 = vmatpush2.msra.mxu0 0.0
        %436 = vmatprep.subr.mxu0 0.0
        %437 = vmatpush2.msra.mxu0 0.0
        %438 = vmatprep.subr.mxu0 0.0
        %439 = vmatpush2.msra.mxu0 0.0
        %440 = vmatprep.subr.mxu0 0.0
        %441 = vmatpush2.msra.mxu0 0.0
        %442 = vmatprep.subr.mxu0 0.0
        %443 = vmatpush2.msra.mxu0 0.0
        %444 = vmatprep.mubr.f32.mxu0 0.0
        %445 = vmatmul.mubr.f32.gmra.mxu0 %v378
        %v446 = vpop.f32.mrf.mxu0
        %v447 = vadd.f32 %v374, %v446
        %v448 = vpop.f32.mrf.mxu0
        %449 = vdwg.mxu0
        %450 = vst [vmem:[%s322] sm:$0xff] %v447
        %s451 = sand.u32 %s172, 1
        %s452 = scalar_lea.sflag [#allocation5], %s451
        %s453 = sand.u32 %s172, 1
        %s454 = smul.addr %s453, 8
        %s455 = scalar_lea.vmem [#allocation9], %s454
        // Predicated region
        $region57: #{tpu_custom_call.1} parent=39 // pred_check
          %p456 = pneg %p182
        $region58: #{tpu_custom_call.1} parent=39 // pred_check_branch
          %458 = sbr.rel (%p456) target = $region60
        $region59: #{tpu_custom_call.1} parent=39 // pred_region
          %s460 = ssub.s32 128, 128
          %461 = vsyncadd %s452, %s460
          %s462 = sadd.s32 %s30, %s29
          %s463 = smul.addr %s462, 128
          %s464 = scalar_lea.hbm %s5, %s463
          %s466 = sshll.u32 %s455, 4
          %s467 = int_to_ptr.vmem [resolvable:$true] %s466
          %469 = dma.vmem_to_hbm [thread:$0]  %s467, 128, %s464, %s452
        $region60: #{tpu_custom_call.1} parent=39 // pred_fallthru
          _
      $region40: #{tpu_custom_call.1} parent=5 // pred_fallthru
        _
      %p470 = scmp.le.s32.totalorder 2, %s20
      // Predicated region
      $region61: #{tpu_custom_call.1} parent=5 // pred_check
        %p471 = pneg %p470
      $region62: #{tpu_custom_call.1} parent=5 // pred_check_branch
        %473 = sbr.rel (%p471) target = $region64
      $region63: #{tpu_custom_call.1} parent=5 // pred_region
        %s474 = ssub.s32 %s20, 2
        // Predicated region
        $region65: #{tpu_custom_call.1} parent=63 // pred_check
          %p475 = pneg %p188
        $region66: #{tpu_custom_call.1} parent=63 // pred_check_branch
          %477 = sbr.rel (%p475) target = $region68
        $region67: #{tpu_custom_call.1} parent=63 // pred_region
          %s478 = sand.u32 %s173, 1
          %s479 = scalar_lea.sflag [#allocation5], %s478
          %s480 = sand.u32 %s173, 1
          %s481 = smul.addr %s480, 8
          %s482 = scalar_lea.vmem [#allocation9], %s481
          %483 = dma.done %s479, 128
        $region68: #{tpu_custom_call.1} parent=63 // pred_fallthru
          _
      $region64: #{tpu_custom_call.1} parent=5 // pred_fallthru
        _
    $region6: #{tpu_custom_call.1} parent=1 // loop_footer
      %s24 = sadd.s32 1, %s20
    $region7: #{tpu_custom_call.1} parent=1 // loop_footer_branch
      %19 = sbr.rel target = $region3
    $region8: #{tpu_custom_call.1} parent=1 // loop_exit
      _
    %484 = vsyncpa [#allocation4], 1
    %s485 = scalar_lea.sflag [#allocation4], 1
    %486 = vsyncpa %s485, 1
    %487 = vsyncpa [#allocation7], 1
    %s488 = scalar_lea.sflag [#allocation7], 1
    %489 = vsyncpa %s488, 1
    %490 = vsyncpa [#allocation5], 1
    %s491 = scalar_lea.sflag [#allocation5], 1
    %492 = vsyncpa %s491, 1

</llo_original>
